<compile_context>
chip_gen: v7x
topology: tpu7x:2x2x1
jax: 0.10.0
libtpu: 0.0.40
codegen_flags: <defaults>
</compile_context>

<pallas_src>
import functools

import jax
import jax.numpy as jnp
from jax.experimental import pallas as pl
from jax.experimental.pallas import tpu as pltpu


def _round_up(a: int, b: int) -> int:
    return (a + b - 1) // b * b


def _patch_embed_kernel(p_ref, w_ref, b_ref, o_ref):
    # p_ref: (tm, K), w_ref: (K, E_pad), b_ref: (1, E_pad), o_ref: (tm, E_pad)
    # Single fused expression: MXU matmul (f32 acc) + f32 bias + cast, so only
    # one live f32 tile and the store comes straight off the add.
    o_ref[...] = (
        jnp.dot(p_ref[...], w_ref[...], preferred_element_type=jnp.float32)
        + b_ref[...]
    ).astype(o_ref.dtype)


def _pick_tm(M: int, tm_max: int, mult: int) -> int:
    """Tile size for the flat patch-row axis.

    Preferences (lexicographic):
      1. divides M exactly (no ragged block, no padding / extra HBM copy)
      2. grid_m >= 2 (v7x has 2 TensorCores sharing the parallel grid axis)
      3. multiple of `mult` (16 for 2-byte dtypes -> unmasked packed stores)
      4. as large as possible (amortize ~0.35 us per grid step)
    """
    cap = max(8, min(tm_max, _round_up(M, 8)))
    best_tm, best_key = 8, None
    for tm in range(8, cap + 1, 8):
        grid_m = pl.cdiv(M, tm)
        key = (M % tm == 0, grid_m >= 2, tm % mult == 0, tm)
        if best_key is None or key > best_key:
            best_key, best_tm = key, tm
    return best_tm


def prepare_proj_params(weight, bias, *, compute_dtype=jnp.bfloat16):
    """Hoistable weight prep: OIHW conv weight -> ([K, E_pad], [1, E_pad]).

    Weights are static in practice; callers can precompute this once and pass
    the result via `proj_params=` to avoid the per-call reshape/pad.
    """
    E = weight.shape[0]
    K = weight.shape[1] * weight.shape[2] * weight.shape[3]
    w_mat = weight.reshape(E, K).T.astype(compute_dtype)   # [K, E], (c,kh,kw) order
    b_mat = bias.reshape(1, E).astype(jnp.float32)          # bias add stays f32
    E_pad = _round_up(E, 128)
    if E_pad != E:
        w_mat = jnp.pad(w_mat, ((0, 0), (0, E_pad - E)))
        b_mat = jnp.pad(b_mat, ((0, 0), (0, E_pad - E)))
    return w_mat, b_mat


def patch_embed_org(x, weight, bias, patch_size, *,
                    compute_dtype=jnp.bfloat16, out_dtype=None,
                    tm_max=1024, proj_params=None):
    """Equivalent of PatchEmbed_org.forward.

    x:      [B, C, H, W]   (NCHW, like PyTorch)
    weight: [E, C, ph, pw] (OIHW conv weight)
    bias:   [E]
    Returns [B, num_patches, E] with num_patches = (H//ph) * (W//pw).

    compute_dtype: dtype of the matmul operands (MXU accumulation is f32).
    out_dtype:     dtype the kernel stores (default: x.dtype).
    """
    B, C, H, W = x.shape
    E = weight.shape[0]
    ph, pw = patch_size
    Hp, Wp = H // ph, W // pw
    num_patches = Hp * Wp
    K = C * ph * pw
    M = B * num_patches
    if out_dtype is None:
        out_dtype = x.dtype

    # Conv2d with stride == kernel silently drops any remainder rows/cols.
    x = x[:, :, : Hp * ph, : Wp * pw]

    # Cast before the rearrange so any materialized copy is at the narrow
    # dtype; the free reshape + transpose produces rows of length K with
    # inner order (c, kh, kw), matching the flattened OIHW weight.
    x = x.astype(compute_dtype)
    patches = x.reshape(B, C, Hp, ph, Wp, pw)
    patches = patches.transpose(0, 2, 4, 1, 3, 5)            # [B, Hp, Wp, C, ph, pw]
    patches = patches.reshape(M, K)

    if proj_params is None:
        w_mat, b_mat = prepare_proj_params(weight, bias, compute_dtype=compute_dtype)
    else:
        w_mat, b_mat = proj_params
    E_pad = w_mat.shape[1]

    # Tile the flat M axis.  Sub-32-bit dtypes pack along sublanes, so round
    # the tile to 16 (bf16) / 32 (1-byte) to keep packed stores unmasked.
    itemsize = min(jnp.dtype(compute_dtype).itemsize, jnp.dtype(out_dtype).itemsize)
    mult = {1: 32, 2: 16}.get(itemsize, 8)
    tm = _pick_tm(M, tm_max, mult)
    grid_m = pl.cdiv(M, tm)

    y = pl.pallas_call(
        _patch_embed_kernel,
        out_shape=jax.ShapeDtypeStruct((M, E_pad), out_dtype),
        grid_spec=pltpu.PrefetchScalarGridSpec(
            num_scalar_prefetch=0,
            grid=(grid_m,),
            in_specs=[
                # Patches: tiled over M, default double-buffering.
                pl.BlockSpec((tm, K), lambda i: (i, 0)),
                # Weight / bias are grid-invariant: fetched once, single buffer.
                pl.BlockSpec((K, E_pad), lambda i: (0, 0),
                             pipeline_mode=pl.Buffered(1)),
                pl.BlockSpec((1, E_pad), lambda i: (0, 0),
                             pipeline_mode=pl.Buffered(1)),
            ],
            out_specs=pl.BlockSpec((tm, E_pad), lambda i: (i, 0)),
        ),
        compiler_params=pltpu.CompilerParams(
            dimension_semantics=("parallel",),
            # Let XLA fold the patch-extraction rearrange into the Pallas
            # input DMA instead of a separate HBM round trip (when possible).
            allow_input_fusion=[True, False, False],
        ),
    )(patches, w_mat, b_mat)

    # Drop E padding (free for AudioMAE, E=768) and restore [B, num_patches, E].
    if E_pad != E:
        y = y[:, :E]
    return y.reshape(B, num_patches, E)


if __name__ == "__main__":
    def reference(x, weight, bias, patch_size):
        ph, pw = patch_size
        B, C, H, W = x.shape
        E = weight.shape[0]
        conv = jax.lax.conv_general_dilated(
            x, weight, window_strides=patch_size, padding="VALID",
            dimension_numbers=("NCHW", "OIHW", "NCHW"),
            precision=jax.lax.Precision.HIGHEST)
        conv = conv + bias.reshape(1, E, 1, 1)
        Hp, Wp = H // ph, W // pw
        return conv.reshape(B, E, Hp * Wp).transpose(0, 2, 1)

    key = jax.random.PRNGKey(0)

    # Config 1: small single-tile case (module-consistent toy shapes).
    # Config 2: multi-grid-step case with a non-divisible H (exercises crop).
    configs = [
        dict(B=2, C=4, H=16, W=16, patch=(8, 8), E=32),
        dict(B=2, C=1, H=44, W=32, patch=(8, 8), E=32),
    ]

    for cfg in configs:
        B, C, H, W, E = cfg["B"], cfg["C"], cfg["H"], cfg["W"], cfg["E"]
        patch = cfg["patch"]
        k1, k2, k3, key = jax.random.split(key, 4)
        x = jax.random.normal(k1, (B, C, H, W), dtype=jnp.float32)
        weight = jax.random.normal(
            k2, (E, C, patch[0], patch[1]), dtype=jnp.float32) * 0.02
        bias = jax.random.normal(k3, (E,), dtype=jnp.float32) * 0.02

        Hp, Wp = H // patch[0], W // patch[1]
        y_ref = reference(x, weight, bias, patch)

        # f32 compute / f32 out: tight check against the XLA conv reference.
        fn_f32 = jax.jit(functools.partial(
            patch_embed_org, patch_size=patch, compute_dtype=jnp.float32))
        y32 = jax.block_until_ready(fn_f32(x, weight, bias))
        assert y32.shape == (B, Hp * Wp, E), y32.shape
        assert jnp.allclose(y32, y_ref, atol=1e-4, rtol=1e-4)

        # Default path: bf16 operands, f32 MXU accumulation + f32 bias, f32 out.
        fn_def = jax.jit(functools.partial(patch_embed_org, patch_size=patch))
        yd = jax.block_until_ready(fn_def(x, weight, bias))
        assert yd.shape == (B, Hp * Wp, E), yd.shape
        assert yd.dtype == jnp.float32
        assert jnp.allclose(yd, y_ref, atol=5e-2, rtol=5e-2)

        # bf16 output storage path (halves output-side HBM traffic).
        fn_bf = jax.jit(functools.partial(
            patch_embed_org, patch_size=patch, out_dtype=jnp.bfloat16))
        yb = jax.block_until_ready(fn_bf(x, weight, bias))
        assert yb.shape == (B, Hp * Wp, E), yb.shape
        assert yb.dtype == jnp.bfloat16
        assert jnp.allclose(yb.astype(jnp.float32), y_ref, atol=5e-2, rtol=5e-2)

    print("KERNEL_OK")
</pallas_src>

<mosaic_0001>
module attributes {stable_mosaic.version = 11 : i64} {
  func.func @_patch_embed_kernel(%arg0: i32, %arg1: memref<8x256xf32, #tpu.memory_space<vmem>>, %arg2: memref<256x128xf32, #tpu.memory_space<vmem>>, %arg3: memref<1x128xf32, #tpu.memory_space<vmem>>, %arg4: memref<8x128xf32, #tpu.memory_space<vmem>>) attributes {dimension_semantics = [#tpu.dimension_semantics<parallel>], iteration_bounds = array<i64: 1>, scalar_prefetch = 0 : i64, scratch_operands = 0 : i64, tpu.core_type = #tpu.core_type<tc>, window_params = [{transform_indices = @transform_0, window_bounds = array<i64: 8, 256>}, {pipeline_mode = #tpu.pipeline_mode<synchronous>, transform_indices = @transform_1, window_bounds = array<i64: 256, 128>}, {pipeline_mode = #tpu.pipeline_mode<synchronous>, transform_indices = @transform_2, window_bounds = array<i64: 1, 128>}, {transform_indices = @transform_3, window_bounds = array<i64: 8, 128>}]} {
    %c0 = arith.constant 0 : index
    %c0_0 = arith.constant 0 : index
    %0 = vector.load %arg1[%c0, %c0_0] : memref<8x256xf32, #tpu.memory_space<vmem>>, vector<8x256xf32>
    %c0_1 = arith.constant 0 : index
    %c0_2 = arith.constant 0 : index
    %1 = vector.load %arg2[%c0_1, %c0_2] : memref<256x128xf32, #tpu.memory_space<vmem>>, vector<256x128xf32>
    %cst = arith.constant dense<0.000000e+00> : vector<8x128xf32>
    %2 = tpu.matmul %0, %1, %cst {dimension_numbers = #tpu.dot_dimension_numbers<[1], [0], [0], [1], [0, 0, 1, 1], [], []>} : vector<8x256xf32>, vector<256x128xf32>, vector<8x128xf32> -> vector<8x128xf32>
    %c0_3 = arith.constant 0 : index
    %c0_4 = arith.constant 0 : index
    %3 = vector.load %arg3[%c0_3, %c0_4] : memref<1x128xf32, #tpu.memory_space<vmem>>, vector<1x128xf32>
    %4 = vector.broadcast %3 : vector<1x128xf32> to vector<8x128xf32>
    %5 = arith.addf %2, %4 : vector<8x128xf32>
    %c0_5 = arith.constant 0 : index
    %c0_6 = arith.constant 0 : index
    %6 = vector.load %arg4[%c0_5, %c0_6] : memref<8x128xf32, #tpu.memory_space<vmem>>, vector<8x128xf32>
    tpu.vector_store %arg4[%c0_5, %c0_6], %5 {strides = array<i32>} : memref<8x128xf32, #tpu.memory_space<vmem>>, vector<8x128xf32>,
    return
  }
  func.func @transform_0(%arg0: i32) -> (i32, i32) {
    %c0_i32 = arith.constant 0 : i32
    %c0_i32_0 = arith.constant 0 : i32
    return %arg0, %c0_i32 : i32, i32
  }
  func.func @transform_1(%arg0: i32) -> (i32, i32) {
    %c0_i32 = arith.constant 0 : i32
    %c0_i32_0 = arith.constant 0 : i32
    %c0_i32_1 = arith.constant 0 : i32
    return %c0_i32, %c0_i32_0 : i32, i32
  }
  func.func @transform_2(%arg0: i32) -> (i32, i32) {
    %c0_i32 = arith.constant 0 : i32
    %c0_i32_0 = arith.constant 0 : i32
    %c0_i32_1 = arith.constant 0 : i32
    return %c0_i32, %c0_i32_0 : i32, i32
  }
  func.func @transform_3(%arg0: i32) -> (i32, i32) {
    %c0_i32 = arith.constant 0 : i32
    %c0_i32_0 = arith.constant 0 : i32
    return %arg0, %c0_i32 : i32, i32
  }
}

</mosaic_0001>

<llo_original>
// kernel: patch_embed_org.1
$region0: #{patch_embed_org.1}
  #allocation0 [shape = 'u32[]', space=smem, size = 0x4, offset = 0x4, fixed_abs, tag = 'smem constant byte address 0x4 - core index']
  #allocation1 [shape = 'u32[144,128]{1,0:T(1,128)}', space=vmem, size = 0x12000, scoped, tag = 'internal scratch']
  %s0 = inlined_call_operand.vmem [shape: f32[8,256], index: 0, kind: input, shape index: {}]
  %s1 = inlined_call_operand.vmem [shape: f32[256,128], index: 1, kind: input, shape index: {}]
  %s2 = inlined_call_operand.vmem [shape: f32[1,128], index: 2, kind: input, shape index: {}]
  %s3 = inlined_call_operand.hbm [shape: f32[8,128], index: 3, kind: output, shape index: {}]
  %s4 = sld [smem:[#allocation0]]
  $region22: #{patch_embed_org.1} parent=0
    _
  %s6 = ssub.s32 1, %s4
  %s7 = scalar_select 0, %s6, %s4
  $region1: #{patch_embed_org.1} parent=0
    #allocation2 [shape = 'u8[4096]{0}', space=vmem, size = 0x1000, scoped, tag = 'output window, operand 0, single buffered']
    #allocation3 [shape = 's32[1]{0}', space=sflag, size = 0x4, scoped, tag = 'scoped memory for patch_embed_org.1']
    %8 = vsyncpa [#allocation3], 0
    // Predicated region
    $region2: #{patch_embed_org.1} parent=1 // pred_check
      _
    $region3: #{patch_embed_org.1} parent=1 // pred_check_branch
      %10 = sbr.rel (0) target = $region5
    $region4: #{patch_embed_org.1} parent=1 // pred_region
      _
    $region5: #{patch_embed_org.1} parent=1 // pred_fallthru
      _
    // Predicated region
    $region6: #{patch_embed_org.1} parent=1 // pred_check
      _
    $region7: #{patch_embed_org.1} parent=1 // pred_check_branch
      %12 = sbr.rel (0) target = $region9
    $region8: #{patch_embed_org.1} parent=1 // pred_region
      _
    $region9: #{patch_embed_org.1} parent=1 // pred_fallthru
      _
    // Predicated region
    $region10: #{patch_embed_org.1} parent=1 // pred_check
      _
    $region11: #{patch_embed_org.1} parent=1 // pred_check_branch
      %14 = sbr.rel (0) target = $region13
    $region12: #{patch_embed_org.1} parent=1 // pred_region
      _
    $region13: #{patch_embed_org.1} parent=1 // pred_fallthru
      _
    %v15 = vld [vmem:[%s0] sm:$0xff]
    %v16 = vld [vmem:[%s0 + $0x8] sm:$0xff]
    %v17 = vld [vmem:[%s1] sm:$0xff]
    %v18 = vld [vmem:[%s1 + $0x8] sm:$0xff]
    %v19 = vld [vmem:[%s1 + $0x10] sm:$0xff]
    %v20 = vld [vmem:[%s1 + $0x18] sm:$0xff]
    %v21 = vld [vmem:[%s1 + $0x20] sm:$0xff]
    %v22 = vld [vmem:[%s1 + $0x28] sm:$0xff]
    %v23 = vld [vmem:[%s1 + $0x30] sm:$0xff]
    %v24 = vld [vmem:[%s1 + $0x38] sm:$0xff]
    %v25 = vld [vmem:[%s1 + $0x40] sm:$0xff]
    %v26 = vld [vmem:[%s1 + $0x48] sm:$0xff]
    %v27 = vld [vmem:[%s1 + $0x50] sm:$0xff]
    %v28 = vld [vmem:[%s1 + $0x58] sm:$0xff]
    %v29 = vld [vmem:[%s1 + $0x60] sm:$0xff]
    %v30 = vld [vmem:[%s1 + $0x68] sm:$0xff]
    %v31 = vld [vmem:[%s1 + $0x70] sm:$0xff]
    %v32 = vld [vmem:[%s1 + $0x78] sm:$0xff]
    %v33 = vld [vmem:[%s1 + $0x80] sm:$0xff]
    %v34 = vld [vmem:[%s1 + $0x88] sm:$0xff]
    %v35 = vld [vmem:[%s1 + $0x90] sm:$0xff]
    %v36 = vld [vmem:[%s1 + $0x98] sm:$0xff]
    %v37 = vld [vmem:[%s1 + $0xa0] sm:$0xff]
    %v38 = vld [vmem:[%s1 + $0xa8] sm:$0xff]
    %v39 = vld [vmem:[%s1 + $0xb0] sm:$0xff]
    %v40 = vld [vmem:[%s1 + $0xb8] sm:$0xff]
    %v41 = vld [vmem:[%s1 + $0xc0] sm:$0xff]
    %v42 = vld [vmem:[%s1 + $0xc8] sm:$0xff]
    %v43 = vld [vmem:[%s1 + $0xd0] sm:$0xff]
    %v44 = vld [vmem:[%s1 + $0xd8] sm:$0xff]
    %v45 = vld [vmem:[%s1 + $0xe0] sm:$0xff]
    %v46 = vld [vmem:[%s1 + $0xe8] sm:$0xff]
    %v47 = vld [vmem:[%s1 + $0xf0] sm:$0xff]
    %v48 = vld [vmem:[%s1 + $0xf8] sm:$0xff]
    %v49 = vld [vmem:[%s2] sm:$0x1]
    %v51 = vlaneseq
    %v52 = vshrl.u32 %v51, 7
    %v53 = vsub.s32 0, %v52
    %v54 = vrot.slane %v49, %v53
    %56 = vmatprep.subr.mxu0 0.0
    %57 = vmatpush1.msra.mxu0 %v17
    %58 = vmatprep.subr.mxu0 0.0
    %59 = vmatpush1.msra.mxu0 %v18
    %60 = vmatprep.subr.mxu0 0.0
    %61 = vmatpush1.msra.mxu0 %v19
    %62 = vmatprep.subr.mxu0 0.0
    %63 = vmatpush1.msra.mxu0 %v20
    %64 = vmatprep.subr.mxu0 0.0
    %65 = vmatpush1.msra.mxu0 %v21
    %66 = vmatprep.subr.mxu0 0.0
    %67 = vmatpush1.msra.mxu0 %v22
    %68 = vmatprep.subr.mxu0 0.0
    %69 = vmatpush1.msra.mxu0 %v23
    %70 = vmatprep.subr.mxu0 0.0
    %71 = vmatpush1.msra.mxu0 %v24
    %72 = vmatprep.subr.mxu0 0.0
    %73 = vmatpush1.msra.mxu0 %v25
    %74 = vmatprep.subr.mxu0 0.0
    %75 = vmatpush1.msra.mxu0 %v26
    %76 = vmatprep.subr.mxu0 0.0
    %77 = vmatpush1.msra.mxu0 %v27
    %78 = vmatprep.subr.mxu0 0.0
    %79 = vmatpush1.msra.mxu0 %v28
    %80 = vmatprep.subr.mxu0 0.0
    %81 = vmatpush1.msra.mxu0 %v29
    %82 = vmatprep.subr.mxu0 0.0
    %83 = vmatpush1.msra.mxu0 %v30
    %84 = vmatprep.subr.mxu0 0.0
    %85 = vmatpush1.msra.mxu0 %v31
    %86 = vmatprep.subr.mxu0 0.0
    %87 = vmatpush1.msra.mxu0 %v32
    %88 = vmatprep.subr.mxu0 0.0
    %89 = vmatpush1.msra.mxu0 %v33
    %90 = vmatprep.subr.mxu0 0.0
    %91 = vmatpush1.msra.mxu0 %v34
    %92 = vmatprep.subr.mxu0 0.0
    %93 = vmatpush1.msra.mxu0 %v35
    %94 = vmatprep.subr.mxu0 0.0
    %95 = vmatpush1.msra.mxu0 %v36
    %96 = vmatprep.subr.mxu0 0.0
    %97 = vmatpush1.msra.mxu0 %v37
    %98 = vmatprep.subr.mxu0 0.0
    %99 = vmatpush1.msra.mxu0 %v38
    %100 = vmatprep.subr.mxu0 0.0
    %101 = vmatpush1.msra.mxu0 %v39
    %102 = vmatprep.subr.mxu0 0.0
    %103 = vmatpush1.msra.mxu0 %v40
    %104 = vmatprep.subr.mxu0 0.0
    %105 = vmatpush1.msra.mxu0 %v41
    %106 = vmatprep.subr.mxu0 0.0
    %107 = vmatpush1.msra.mxu0 %v42
    %108 = vmatprep.subr.mxu0 0.0
    %109 = vmatpush1.msra.mxu0 %v43
    %110 = vmatprep.subr.mxu0 0.0
    %111 = vmatpush1.msra.mxu0 %v44
    %112 = vmatprep.subr.mxu0 0.0
    %113 = vmatpush1.msra.mxu0 %v45
    %114 = vmatprep.subr.mxu0 0.0
    %115 = vmatpush1.msra.mxu0 %v46
    %116 = vmatprep.subr.mxu0 0.0
    %117 = vmatpush1.msra.mxu0 %v47
    %118 = vmatprep.subr.mxu0 0.0
    %119 = vmatpush1.msra.mxu0 %v48
    %120 = vmatprep.mubr.f32.mxu0 %v16
    %121 = vmatmul.mubr.f32.gmra.mrb[0].mxu0 %v15
    %v122 = vpop.f32.mrb[0].mxu0
    %v123 = vadd.f32 %v54, %v122
    %v124 = vpop.f32.mrb[0].mxu0
    %125 = vdwg.mxu0
    %126 = vst [vmem:[#allocation2] sm:$0xff] %v123
    // Predicated region
    $region14: #{patch_embed_org.1} parent=1 // pred_check
      _
    $region15: #{patch_embed_org.1} parent=1 // pred_check_branch
      %128 = sbr.rel (0) target = $region17
    $region16: #{patch_embed_org.1} parent=1 // pred_region
      %s130 = ssub.s32 128, 128
      %131 = vsyncadd [#allocation3], %s130
      %s133 = sshll.u32 [#allocation2], 4
      %s134 = int_to_ptr.vmem [resolvable:$true] %s133
      %136 = dma.vmem_to_hbm [thread:$0]  %s134, 128, %s3, [#allocation3]
    $region17: #{patch_embed_org.1} parent=1 // pred_fallthru
      _
    // Predicated region
    $region18: #{patch_embed_org.1} parent=1 // pred_check
      _
    $region19: #{patch_embed_org.1} parent=1 // pred_check_branch
      %138 = sbr.rel (0) target = $region21
    $region20: #{patch_embed_org.1} parent=1 // pred_region
      %139 = dma.done [#allocation3], 128
    $region21: #{patch_embed_org.1} parent=1 // pred_fallthru
      _
    %140 = vsyncpa [#allocation3], 1

</llo_original>
